<compile_context>
chip_gen: v6e
topology: v6e:2x2x1
jax: 0.10.0
libtpu: 0.0.40
codegen_flags: <defaults>
</compile_context>

<pallas_src>
import jax
import jax.numpy as jnp
from jax.experimental import pallas as pl
from jax.experimental.pallas import tpu as pltpu

_LANE = 128      # lane width (last dim of a vreg)
_SUBLANE = 8     # sublane count (second-to-last dim of a vreg)
_VMEM_BUDGET = 12 * 1024 * 1024   # conservative: below every generation's scoped default


def _round_up(x, m):
    return ((x + m - 1) // m) * m


# ----------------------------------------------------------------------------
# Pallas kernel: fused 3-layer MLP (Linear+ReLU, Linear+ReLU, Linear)
# One grid point = (batch tile b, head h).  x is batch-tiled (stays resident
# across the inner head axis); weights/biases are full per-head blocks; the
# output tile is lane-dense (128 cols) and stored in bf16 to halve writeback.
# ----------------------------------------------------------------------------
def _fused_mlp3_kernel(x_ref, w0_ref, b0_ref, w1_ref, b1_ref, w2_ref, b2_ref, out_ref):
    cdt = w0_ref.dtype
    x = x_ref[...].astype(cdt)                                         # cast f32 obs -> bf16 in-kernel
    h0 = jnp.dot(x, w0_ref[...], preferred_element_type=jnp.float32) + b0_ref[...]
    h0 = jnp.maximum(h0, 0.0).astype(cdt)                              # ReLU (VPU), back to bf16
    h1 = jnp.dot(h0, w1_ref[...], preferred_element_type=jnp.float32) + b1_ref[...]
    h1 = jnp.maximum(h1, 0.0).astype(cdt)
    out = jnp.dot(h1, w2_ref[...], preferred_element_type=jnp.float32) + b2_ref[...]
    out_ref[...] = out.astype(out_ref.dtype)                           # lane-dense (TB, 128k) store


def _fused_mlp3_forward(x, sp, *, batch_tile=2048, out_dtype=jnp.bfloat16):
    """x: (B, obs_dim) f32 -> (H, B_pad, A_pad) out_dtype; caller slices valid rows/cols.

    sp: stacked + lane-padded params:
        w0 (H, obs_dim, Hp) bf16, b0 (H, 1, Hp) f32,
        w1 (H, Hp, Hp)      bf16, b1 (H, 1, Hp) f32,
        w2 (H, Hp, Ap)      bf16, b2 (H, 1, Ap) f32.
    """
    B, obs_dim = x.shape
    H, _, hid_p = sp["w0"].shape
    a_p = sp["w2"].shape[2]

    # Batch tile: multiple of the sublane count, capped by batch_tile, VMEM-checked.
    tb = _round_up(min(int(batch_tile), _round_up(B, _SUBLANE)), _SUBLANE)

    def _vmem_bytes(tile):
        # double-buffered x tile + out tile + one head's weights/biases (double-buffered)
        x_bytes = tile * obs_dim * x.dtype.itemsize
        out_bytes = tile * a_p * jnp.dtype(out_dtype).itemsize
        w_bytes = sum(int(sp[k][0].size) * sp[k].dtype.itemsize for k in sp)
        return 2 * (x_bytes + out_bytes + w_bytes)

    while tb > _SUBLANE and _vmem_bytes(tb) > _VMEM_BUDGET:
        tb = _round_up(tb // 2, _SUBLANE)

    b_pad = _round_up(B, tb)
    if b_pad != B:                      # skip the pad op when B is already a tile multiple
        x = jnp.pad(x, ((0, b_pad - B), (0, 0)))
    n_bt = b_pad // tb

    def _head_block(arr):
        # Full per-head block; index only depends on the (inner) head axis.
        return pl.BlockSpec((None,) + arr.shape[1:], lambda b, h: (h, 0, 0))

    flops = 2 * H * b_pad * (obs_dim * hid_p + hid_p * hid_p + hid_p * a_p)
    bytes_accessed = (
        x.size * x.dtype.itemsize
        + sum(int(sp[k].size) * sp[k].dtype.itemsize for k in sp)
        + H * b_pad * a_p * jnp.dtype(out_dtype).itemsize
    )

    return pl.pallas_call(
        _fused_mlp3_kernel,
        out_shape=jax.ShapeDtypeStruct((H, b_pad, a_p), out_dtype),
        grid=(n_bt, H),                                                # batch LEADING -> megacore shards batch
        in_specs=[
            pl.BlockSpec((tb, obs_dim), lambda b, h: (b, 0)),          # x: batch-tiled, resident across heads
            _head_block(sp["w0"]), _head_block(sp["b0"]),
            _head_block(sp["w1"]), _head_block(sp["b1"]),
            _head_block(sp["w2"]), _head_block(sp["b2"]),
        ],
        out_specs=pl.BlockSpec((None, tb, a_p), lambda b, h: (h, b, 0)),
        compiler_params=pltpu.CompilerParams(
            dimension_semantics=("parallel", "arbitrary")),
        cost_estimate=pl.CostEstimate(
            flops=int(flops), transcendentals=0, bytes_accessed=int(bytes_accessed)),
    )(x, sp["w0"], sp["b0"], sp["w1"], sp["b1"], sp["w2"], sp["b2"])


# ----------------------------------------------------------------------------
# Parameters
# ----------------------------------------------------------------------------
def _init_head_params(key, obs_dim, enc_hidden, head_hidden, action_dim,
                      weight_dtype=jnp.bfloat16):
    """One head's params, shapes matching the PyTorch module's Linears.
    Weights (in_features, out_features) so the kernel does x @ W directly."""
    keys = jax.random.split(key, 6)
    s = 0.1
    return {
        # FCEncoder: Linear(obs_dim, enc_hidden)
        "w0": (s * jax.random.normal(keys[0], (obs_dim, enc_hidden), jnp.float32)).astype(weight_dtype),
        "b0": s * jax.random.normal(keys[1], (1, enc_hidden), jnp.float32),
        # DiscreteHead MLP layer: Linear(enc_hidden, head_hidden)
        "w1": (s * jax.random.normal(keys[2], (enc_hidden, head_hidden), jnp.float32)).astype(weight_dtype),
        "b1": s * jax.random.normal(keys[3], (1, head_hidden), jnp.float32),
        # DiscreteHead final: Linear(head_hidden, action_dim)
        "w2": (s * jax.random.normal(keys[4], (head_hidden, action_dim), jnp.float32)).astype(weight_dtype),
        "b2": s * jax.random.normal(keys[5], (1, action_dim), jnp.float32),
    }


def _stack_and_pad(plist):
    """Stack per-head param dicts into (H, ...) arrays and zero-pad feature dims
    to multiples of 128 lanes (exact math: padded weights/biases are zero)."""
    obs_dim = plist[0]["w0"].shape[0]
    enc_h = plist[0]["w0"].shape[1]
    head_h = plist[0]["w1"].shape[1]
    a = plist[0]["w2"].shape[1]
    enc_hp = _round_up(enc_h, _LANE)
    head_hp = _round_up(head_h, _LANE)
    a_p = _round_up(a, _LANE)

    def pad(arr, rows, cols):
        return jnp.pad(arr, ((0, rows - arr.shape[0]), (0, cols - arr.shape[1])))

    def stack(name, rows, cols):
        return jnp.stack([pad(p[name], rows, cols) for p in plist], axis=0)

    return {
        "w0": stack("w0", obs_dim, enc_hp),
        "b0": stack("b0", 1, enc_hp),
        "w1": stack("w1", enc_hp, head_hp),
        "b1": stack("b1", 1, head_hp),
        "w2": stack("w2", head_hp, a_p),
        "b2": stack("b2", 1, a_p),
    }


# ----------------------------------------------------------------------------
# DiscreteQAC (FCEncoder + DiscreteHead, default hyper-params)
# ----------------------------------------------------------------------------
class DiscreteQAC:
    mode = ["compute_actor", "compute_critic"]

    def __init__(self, agent_obs_shape, global_obs_shape, action_shape,
                 encoder_hidden_size_list=(64,), twin_critic=False,
                 actor_head_hidden_size=64, critic_head_hidden_size=64,
                 weight_dtype=jnp.bfloat16, out_dtype=jnp.bfloat16,
                 batch_tile=2048, seed=0):
        # TODO(synk): ConvEncoder path (3-D obs_shape) is not implemented; only FCEncoder.
        assert isinstance(agent_obs_shape, int), "only FCEncoder (1-D obs) is modeled here"
        enc_h = encoder_hidden_size_list[-1]
        self.action_shape = int(action_shape)
        self.twin_critic = twin_critic
        self.batch_tile = batch_tile
        self.out_dtype = out_dtype

        key = jax.random.PRNGKey(seed)
        k_actor, k_c0, k_c1 = jax.random.split(key, 3)

        # Unpadded per-head params (kept for the pure-JAX reference check).
        self.actor_params = _init_head_params(
            k_actor, agent_obs_shape, enc_h, actor_head_hidden_size, action_shape, weight_dtype)
        critic_keys = [k_c0, k_c1] if twin_critic else [k_c0]
        self.critic_params = [
            _init_head_params(k, agent_obs_shape, enc_h, critic_head_hidden_size,
                              action_shape, weight_dtype)
            for k in critic_keys
        ]

        # Stacked + lane-padded params consumed by the fused kernel.
        self._actor_stack = _stack_and_pad([self.actor_params])
        self._critic_stack = _stack_and_pad(self.critic_params)
        # Joint stack (actor head 0, critic heads 1..) for the fused actor+critic step.
        self._joint_stack = _stack_and_pad([self.actor_params] + self.critic_params)

    def forward(self, inputs, mode):
        assert mode in self.mode, f"not support forward mode: {mode}/{self.mode}"
        return getattr(self, mode)(inputs)

    def _run(self, obs, stack):
        return _fused_mlp3_forward(obs, stack, batch_tile=self.batch_tile,
                                   out_dtype=self.out_dtype)

    def compute_actor(self, inputs):
        obs = inputs["obs"]
        out = self._run(obs, self._actor_stack)
        logit = out[0, :obs.shape[0], :self.action_shape].astype(jnp.float32)
        return {"logit": logit}

    def compute_critic(self, inputs):
        obs = inputs["obs"]
        out = self._run(obs, self._critic_stack)
        B, A = obs.shape[0], self.action_shape
        if self.twin_critic:
            return {"q_value": [out[0, :B, :A].astype(jnp.float32),
                                out[1, :B, :A].astype(jnp.float32)]}
        return {"q_value": out[0, :B, :A].astype(jnp.float32)}

    def compute_actor_critic(self, inputs):
        """One fused launch for actor + critic(s): one obs DMA, one pallas_call."""
        obs = inputs["obs"]
        out = self._run(obs, self._joint_stack)
        B, A = obs.shape[0], self.action_shape
        logit = out[0, :B, :A].astype(jnp.float32)
        if self.twin_critic:
            q = [out[1, :B, :A].astype(jnp.float32), out[2, :B, :A].astype(jnp.float32)]
        else:
            q = out[1, :B, :A].astype(jnp.float32)
        return {"logit": logit, "q_value": q}


# ----------------------------------------------------------------------------
# Reference (plain JAX, same bf16-weight / f32-accumulate math) for correctness
# ----------------------------------------------------------------------------
def _mlp3_ref(x, p):
    cdt = p["w0"].dtype
    h0 = jnp.maximum(
        jnp.dot(x.astype(cdt), p["w0"], preferred_element_type=jnp.float32) + p["b0"], 0.0)
    h1 = jnp.maximum(
        jnp.dot(h0.astype(cdt), p["w1"], preferred_element_type=jnp.float32) + p["b1"], 0.0)
    return jnp.dot(h1.astype(cdt), p["w2"], preferred_element_type=jnp.float32) + p["b2"]


if __name__ == "__main__":
    B = 2
    OBS_DIM = 16
    ACTION_DIM = 8

    model = DiscreteQAC(
        agent_obs_shape=OBS_DIM,
        global_obs_shape=OBS_DIM,
        action_shape=ACTION_DIM,
        encoder_hidden_size_list=(64,),
        twin_critic=True,          # exercises the fused 2-head critic path
        seed=0,
    )

    key = jax.random.PRNGKey(0)
    obs = jax.random.normal(key, (B, OBS_DIM), jnp.float32)
    inputs = {"obs": obs}

    actor_out = model.forward(inputs, "compute_actor")
    critic_out = model.forward(inputs, "compute_critic")
    joint_out = model.compute_actor_critic(inputs)      # fused H=3 launch

    logit = jax.block_until_ready(actor_out["logit"])
    q0 = jax.block_until_ready(critic_out["q_value"][0])
    q1 = jax.block_until_ready(critic_out["q_value"][1])
    jlogit = jax.block_until_ready(joint_out["logit"])
    jq0 = jax.block_until_ready(joint_out["q_value"][0])
    jq1 = jax.block_until_ready(joint_out["q_value"][1])

    assert logit.shape == (B, ACTION_DIM)
    assert q0.shape == (B, ACTION_DIM) and q1.shape == (B, ACTION_DIM)
    assert jlogit.shape == (B, ACTION_DIM)

    # Numeric check vs pure-JAX reference (bf16 params / f32 accumulation; the kernel
    # additionally rounds the output to bf16, hence the ~1e-2 tolerance).
    ref_logit = _mlp3_ref(obs, model.actor_params)
    ref_q0 = _mlp3_ref(obs, model.critic_params[0])
    ref_q1 = _mlp3_ref(obs, model.critic_params[1])
    assert jnp.allclose(logit, ref_logit, atol=1e-2, rtol=1e-2)
    assert jnp.allclose(q0, ref_q0, atol=1e-2, rtol=1e-2)
    assert jnp.allclose(q1, ref_q1, atol=1e-2, rtol=1e-2)
    # Fused actor+critic launch must match the separate launches exactly.
    assert jnp.allclose(jlogit, logit) and jnp.allclose(jq0, q0) and jnp.allclose(jq1, q1)

    print("KERNEL_OK")
</pallas_src>

<mosaic_0001>
module attributes {stable_mosaic.version = 11 : i64} {
  func.func @_fused_mlp3_kernel(%arg0: i32, %arg1: i32, %arg2: memref<8x16xf32, #tpu.memory_space<vmem>>, %arg3: memref<1x16x128xbf16, #tpu.memory_space<vmem>>, %arg4: memref<1x1x128xf32, #tpu.memory_space<vmem>>, %arg5: memref<1x128x128xbf16, #tpu.memory_space<vmem>>, %arg6: memref<1x1x128xf32, #tpu.memory_space<vmem>>, %arg7: memref<1x128x128xbf16, #tpu.memory_space<vmem>>, %arg8: memref<1x1x128xf32, #tpu.memory_space<vmem>>, %arg9: memref<1x8x128xbf16, #tpu.memory_space<vmem>>) attributes {dimension_semantics = [#tpu.dimension_semantics<parallel>, #tpu.dimension_semantics<arbitrary>], iteration_bounds = array<i64: 1, 1>, scalar_prefetch = 0 : i64, scratch_operands = 0 : i64, tpu.core_type = #tpu.core_type<tc>, window_params = [{transform_indices = @transform_0, window_bounds = array<i64: 8, 16>}, {transform_indices = @transform_1, window_bounds = array<i64: 1, 16, 128>}, {transform_indices = @transform_2, window_bounds = array<i64: 1, 1, 128>}, {transform_indices = @transform_3, window_bounds = array<i64: 1, 128, 128>}, {transform_indices = @transform_4, window_bounds = array<i64: 1, 1, 128>}, {transform_indices = @transform_5, window_bounds = array<i64: 1, 128, 128>}, {transform_indices = @transform_6, window_bounds = array<i64: 1, 1, 128>}, {transform_indices = @transform_7, window_bounds = array<i64: 1, 8, 128>}]} {
    %c0 = arith.constant 0 : index
    %c0_0 = arith.constant 0 : index
    %0 = vector.load %arg2[%c0, %c0_0] : memref<8x16xf32, #tpu.memory_space<vmem>>, vector<8x16xf32>
    %1 = arith.truncf %0 : vector<8x16xf32> to vector<8x16xbf16>
    %c0_1 = arith.constant 0 : index
    %c0_2 = arith.constant 0 : index
    %c0_3 = arith.constant 0 : index
    %2 = vector.load %arg3[%c0_1, %c0_2, %c0_3] : memref<1x16x128xbf16, #tpu.memory_space<vmem>>, vector<1x16x128xbf16>
    %3 = vector.shape_cast %2 : vector<1x16x128xbf16> to vector<16x128xbf16>
    %cst = arith.constant dense<0.000000e+00> : vector<8x128xf32>
    %4 = tpu.matmul %1, %3, %cst {dimension_numbers = #tpu.dot_dimension_numbers<[1], [0], [0], [1], [0, 0, 1, 1], [], []>} : vector<8x16xbf16>, vector<16x128xbf16>, vector<8x128xf32> -> vector<8x128xf32>
    %c0_4 = arith.constant 0 : index
    %c0_5 = arith.constant 0 : index
    %c0_6 = arith.constant 0 : index
    %5 = vector.load %arg4[%c0_4, %c0_5, %c0_6] : memref<1x1x128xf32, #tpu.memory_space<vmem>>, vector<1x1x128xf32>
    %6 = vector.shape_cast %5 : vector<1x1x128xf32> to vector<1x128xf32>
    %7 = vector.broadcast %6 : vector<1x128xf32> to vector<8x128xf32>
    %8 = arith.addf %4, %7 : vector<8x128xf32>
    %cst_7 = arith.constant 0.000000e+00 : f32
    %9 = vector.broadcast %cst_7 : f32 to vector<8x128xf32>
    %10 = arith.maximumf %8, %9 : vector<8x128xf32>
    %11 = arith.truncf %10 : vector<8x128xf32> to vector<8x128xbf16>
    %c0_8 = arith.constant 0 : index
    %c0_9 = arith.constant 0 : index
    %c0_10 = arith.constant 0 : index
    %12 = vector.load %arg5[%c0_8, %c0_9, %c0_10] : memref<1x128x128xbf16, #tpu.memory_space<vmem>>, vector<1x128x128xbf16>
    %13 = vector.shape_cast %12 : vector<1x128x128xbf16> to vector<128x128xbf16>
    %cst_11 = arith.constant dense<0.000000e+00> : vector<8x128xf32>
    %14 = tpu.matmul %11, %13, %cst_11 {dimension_numbers = #tpu.dot_dimension_numbers<[1], [0], [0], [1], [0, 0, 1, 1], [], []>} : vector<8x128xbf16>, vector<128x128xbf16>, vector<8x128xf32> -> vector<8x128xf32>
    %c0_12 = arith.constant 0 : index
    %c0_13 = arith.constant 0 : index
    %c0_14 = arith.constant 0 : index
    %15 = vector.load %arg6[%c0_12, %c0_13, %c0_14] : memref<1x1x128xf32, #tpu.memory_space<vmem>>, vector<1x1x128xf32>
    %16 = vector.shape_cast %15 : vector<1x1x128xf32> to vector<1x128xf32>
    %17 = vector.broadcast %16 : vector<1x128xf32> to vector<8x128xf32>
    %18 = arith.addf %14, %17 : vector<8x128xf32>
    %cst_15 = arith.constant 0.000000e+00 : f32
    %19 = vector.broadcast %cst_15 : f32 to vector<8x128xf32>
    %20 = arith.maximumf %18, %19 : vector<8x128xf32>
    %21 = arith.truncf %20 : vector<8x128xf32> to vector<8x128xbf16>
    %c0_16 = arith.constant 0 : index
    %c0_17 = arith.constant 0 : index
    %c0_18 = arith.constant 0 : index
    %22 = vector.load %arg7[%c0_16, %c0_17, %c0_18] : memref<1x128x128xbf16, #tpu.memory_space<vmem>>, vector<1x128x128xbf16>
    %23 = vector.shape_cast %22 : vector<1x128x128xbf16> to vector<128x128xbf16>
    %cst_19 = arith.constant dense<0.000000e+00> : vector<8x128xf32>
    %24 = tpu.matmul %21, %23, %cst_19 {dimension_numbers = #tpu.dot_dimension_numbers<[1], [0], [0], [1], [0, 0, 1, 1], [], []>} : vector<8x128xbf16>, vector<128x128xbf16>, vector<8x128xf32> -> vector<8x128xf32>
    %c0_20 = arith.constant 0 : index
    %c0_21 = arith.constant 0 : index
    %c0_22 = arith.constant 0 : index
    %25 = vector.load %arg8[%c0_20, %c0_21, %c0_22] : memref<1x1x128xf32, #tpu.memory_space<vmem>>, vector<1x1x128xf32>
    %26 = vector.shape_cast %25 : vector<1x1x128xf32> to vector<1x128xf32>
    %27 = vector.broadcast %26 : vector<1x128xf32> to vector<8x128xf32>
    %28 = arith.addf %24, %27 : vector<8x128xf32>
    %29 = arith.truncf %28 : vector<8x128xf32> to vector<8x128xbf16>
    %c0_23 = arith.constant 0 : index
    %c0_24 = arith.constant 0 : index
    %c0_25 = arith.constant 0 : index
    %30 = vector.load %arg9[%c0_23, %c0_24, %c0_25] : memref<1x8x128xbf16, #tpu.memory_space<vmem>>, vector<1x8x128xbf16>
    %31 = vector.shape_cast %30 : vector<1x8x128xbf16> to vector<8x128xbf16>
    %32 = vector.shape_cast %29 : vector<8x128xbf16> to vector<1x8x128xbf16>
    tpu.vector_store %arg9[%c0_23, %c0_24, %c0_25], %32 {strides = array<i32>} : memref<1x8x128xbf16, #tpu.memory_space<vmem>>, vector<1x8x128xbf16>,
    return
  }
  func.func @transform_0(%arg0: i32, %arg1: i32) -> (i32, i32) {
    %c0_i32 = arith.constant 0 : i32
    %c0_i32_0 = arith.constant 0 : i32
    return %arg0, %c0_i32 : i32, i32
  }
  func.func @transform_1(%arg0: i32, %arg1: i32) -> (i32, i32, i32) {
    %c0_i32 = arith.constant 0 : i32
    %c0_i32_0 = arith.constant 0 : i32
    %c0_i32_1 = arith.constant 0 : i32
    return %arg1, %c0_i32, %c0_i32_0 : i32, i32, i32
  }
  func.func @transform_2(%arg0: i32, %arg1: i32) -> (i32, i32, i32) {
    %c0_i32 = arith.constant 0 : i32
    %c0_i32_0 = arith.constant 0 : i32
    %c0_i32_1 = arith.constant 0 : i32
    return %arg1, %c0_i32, %c0_i32_0 : i32, i32, i32
  }
  func.func @transform_3(%arg0: i32, %arg1: i32) -> (i32, i32, i32) {
    %c0_i32 = arith.constant 0 : i32
    %c0_i32_0 = arith.constant 0 : i32
    %c0_i32_1 = arith.constant 0 : i32
    return %arg1, %c0_i32, %c0_i32_0 : i32, i32, i32
  }
  func.func @transform_4(%arg0: i32, %arg1: i32) -> (i32, i32, i32) {
    %c0_i32 = arith.constant 0 : i32
    %c0_i32_0 = arith.constant 0 : i32
    %c0_i32_1 = arith.constant 0 : i32
    return %arg1, %c0_i32, %c0_i32_0 : i32, i32, i32
  }
  func.func @transform_5(%arg0: i32, %arg1: i32) -> (i32, i32, i32) {
    %c0_i32 = arith.constant 0 : i32
    %c0_i32_0 = arith.constant 0 : i32
    %c0_i32_1 = arith.constant 0 : i32
    return %arg1, %c0_i32, %c0_i32_0 : i32, i32, i32
  }
  func.func @transform_6(%arg0: i32, %arg1: i32) -> (i32, i32, i32) {
    %c0_i32 = arith.constant 0 : i32
    %c0_i32_0 = arith.constant 0 : i32
    %c0_i32_1 = arith.constant 0 : i32
    return %arg1, %c0_i32, %c0_i32_0 : i32, i32, i32
  }
  func.func @transform_7(%arg0: i32, %arg1: i32) -> (i32, i32, i32) {
    %c0_i32 = arith.constant 0 : i32
    %c0_i32_0 = arith.constant 0 : i32
    return %arg1, %arg0, %c0_i32 : i32, i32, i32
  }
}

</mosaic_0001>

<llo_original>
// kernel: tpu_custom_call.1
$region0: #{tpu_custom_call.1}
  #allocation0 [shape = 'u32[]', space=smem, size = 0x4, offset = 0x4, fixed_abs, tag = 'smem constant byte address 0x4 - core index']
  #allocation1 [shape = 'u32[144,128]{1,0:T(1,128)}', space=vmem, size = 0x12000, scoped, tag = 'internal scratch']
  %s0 = inlined_call_operand.hbm [shape: f32[8,16], index: 0, kind: input, shape index: {}]
  %s1 = inlined_call_operand.hbm [shape: bf16[1,16,128], index: 1, kind: input, shape index: {}]
  %s2 = inlined_call_operand.vmem [shape: f32[1,1,128], index: 2, kind: input, shape index: {}]
  %s3 = inlined_call_operand.hbm [shape: bf16[1,128,128], index: 3, kind: input, shape index: {}]
  %s4 = inlined_call_operand.vmem [shape: f32[1,1,128], index: 4, kind: input, shape index: {}]
  %s5 = inlined_call_operand.hbm [shape: bf16[1,128,128], index: 5, kind: input, shape index: {}]
  %s6 = inlined_call_operand.vmem [shape: f32[1,1,128], index: 6, kind: input, shape index: {}]
  %s7 = inlined_call_operand.hbm [shape: bf16[1,8,128], index: 7, kind: output, shape index: {}]
  %s8 = sld [smem:[#allocation0]]
  $region54: #{tpu_custom_call.1} parent=0
    _
  %s10 = ssub.s32 1, %s8
  %s11 = scalar_select 0, %s10, %s8
  $region1: #{tpu_custom_call.1} parent=0
    #allocation2 [shape = 'u8[4096]{0}', space=vmem, size = 0x1000, scoped, tag = 'input window, operand 0, single buffered']
    #allocation3 [shape = 's32[1]{0}', space=sflag, size = 0x4, scoped, tag = 'scoped memory for tpu_custom_call.1']
    #allocation4 [shape = 's32[1]{0}', space=sflag, size = 0x4, scoped, tag = 'scoped memory for tpu_custom_call.1']
    #allocation5 [shape = 'u8[4096]{0}', space=vmem, size = 0x1000, scoped, tag = 'input window, operand 1, single buffered']
    #allocation6 [shape = 's32[1]{0}', space=sflag, size = 0x4, scoped, tag = 'scoped memory for tpu_custom_call.1']
    #allocation7 [shape = 'u8[32768]{0}', space=vmem, size = 0x8000, scoped, tag = 'input window, operand 3, single buffered']
    #allocation8 [shape = 'u8[32768]{0}', space=vmem, size = 0x8000, scoped, tag = 'input window, operand 5, single buffered']
    #allocation9 [shape = 's32[1]{0}', space=sflag, size = 0x4, scoped, tag = 'scoped memory for tpu_custom_call.1']
    #allocation10 [shape = 'u8[2048]{0}', space=vmem, size = 0x800, scoped, tag = 'output window, operand 0, single buffered']
    %12 = vsyncpa [#allocation3], 0
    %13 = vsyncpa [#allocation6], 0
    %14 = vsyncpa [#allocation9], 0
    %15 = vsyncpa [#allocation4], 0
    // Predicated region
    $region2: #{tpu_custom_call.1} parent=1 // pred_check
      _
    $region3: #{tpu_custom_call.1} parent=1 // pred_check_branch
      %17 = sbr.rel (0) target = $region5
    $region4: #{tpu_custom_call.1} parent=1 // pred_region
      %s19 = ssub.s32 128, 128
      %20 = vsyncadd [#allocation3], %s19
      %s22 = sshll.u32 [#allocation2], 4
      %s23 = int_to_ptr.vmem [resolvable:$true] %s22
      %25 = dma.hbm_to_vmem [thread:$0]  %s0, 128, %s23, [#allocation3]
    $region5: #{tpu_custom_call.1} parent=1 // pred_fallthru
      _
    // Predicated region
    $region6: #{tpu_custom_call.1} parent=1 // pred_check
      _
    $region7: #{tpu_custom_call.1} parent=1 // pred_check_branch
      %27 = sbr.rel (0) target = $region9
    $region8: #{tpu_custom_call.1} parent=1 // pred_region
      %s29 = ssub.s32 128, 128
      %30 = vsyncadd [#allocation6], %s29
      %s31 = sshll.u32 [#allocation5], 4
      %s32 = int_to_ptr.vmem [resolvable:$true] %s31
      %37 = dma.hbm_to_vmem [thread:$0]  %s1, 128, %s32, [#allocation6], 64, 64, 4
    $region9: #{tpu_custom_call.1} parent=1 // pred_fallthru
      _
    // Predicated region
    $region10: #{tpu_custom_call.1} parent=1 // pred_check
      _
    $region11: #{tpu_custom_call.1} parent=1 // pred_check_branch
      %39 = sbr.rel (0) target = $region13
    $region12: #{tpu_custom_call.1} parent=1 // pred_region
      _
    $region13: #{tpu_custom_call.1} parent=1 // pred_fallthru
      _
    // Predicated region
    $region14: #{tpu_custom_call.1} parent=1 // pred_check
      _
    $region15: #{tpu_custom_call.1} parent=1 // pred_check_branch
      %41 = sbr.rel (0) target = $region17
    $region16: #{tpu_custom_call.1} parent=1 // pred_region
      %s43 = ssub.s32 1024, 1024
      %44 = vsyncadd [#allocation6], %s43
      %s45 = sshll.u32 [#allocation7], 4
      %s46 = int_to_ptr.vmem [resolvable:$true] %s45
      %51 = dma.hbm_to_vmem [thread:$0]  %s3, 1024, %s46, [#allocation6], 64, 64, 4
    $region17: #{tpu_custom_call.1} parent=1 // pred_fallthru
      _
    // Predicated region
    $region18: #{tpu_custom_call.1} parent=1 // pred_check
      _
    $region19: #{tpu_custom_call.1} parent=1 // pred_check_branch
      %53 = sbr.rel (0) target = $region21
    $region20: #{tpu_custom_call.1} parent=1 // pred_region
      _
    $region21: #{tpu_custom_call.1} parent=1 // pred_fallthru
      _
    // Predicated region
    $region22: #{tpu_custom_call.1} parent=1 // pred_check
      _
    $region23: #{tpu_custom_call.1} parent=1 // pred_check_branch
      %55 = sbr.rel (0) target = $region25
    $region24: #{tpu_custom_call.1} parent=1 // pred_region
      %s57 = ssub.s32 1024, 1024
      %58 = vsyncadd [#allocation9], %s57
      %s59 = sshll.u32 [#allocation8], 4
      %s60 = int_to_ptr.vmem [resolvable:$true] %s59
      %65 = dma.hbm_to_vmem [thread:$0]  %s5, 1024, %s60, [#allocation9], 64, 64, 4
    $region25: #{tpu_custom_call.1} parent=1 // pred_fallthru
      _
    // Predicated region
    $region26: #{tpu_custom_call.1} parent=1 // pred_check
      _
    $region27: #{tpu_custom_call.1} parent=1 // pred_check_branch
      %67 = sbr.rel (0) target = $region29
    $region28: #{tpu_custom_call.1} parent=1 // pred_region
      _
    $region29: #{tpu_custom_call.1} parent=1 // pred_fallthru
      _
    // Predicated region
    $region30: #{tpu_custom_call.1} parent=1 // pred_check
      _
    $region31: #{tpu_custom_call.1} parent=1 // pred_check_branch
      %69 = sbr.rel (0) target = $region33
    $region32: #{tpu_custom_call.1} parent=1 // pred_region
      %70 = dma.done [#allocation3], 128
    $region33: #{tpu_custom_call.1} parent=1 // pred_fallthru
      _
    // Predicated region
    $region34: #{tpu_custom_call.1} parent=1 // pred_check
      _
    $region35: #{tpu_custom_call.1} parent=1 // pred_check_branch
      %72 = sbr.rel (0) target = $region37
    $region36: #{tpu_custom_call.1} parent=1 // pred_region
      %73 = dma.done [#allocation6], 128
    $region37: #{tpu_custom_call.1} parent=1 // pred_fallthru
      _
    // Predicated region
    $region38: #{tpu_custom_call.1} parent=1 // pred_check
      _
    $region39: #{tpu_custom_call.1} parent=1 // pred_check_branch
      %75 = sbr.rel (0) target = $region41
    $region40: #{tpu_custom_call.1} parent=1 // pred_region
      %76 = dma.done [#allocation6], 1024
    $region41: #{tpu_custom_call.1} parent=1 // pred_fallthru
      _
    // Predicated region
    $region42: #{tpu_custom_call.1} parent=1 // pred_check
      _
    $region43: #{tpu_custom_call.1} parent=1 // pred_check_branch
      %78 = sbr.rel (0) target = $region45
    $region44: #{tpu_custom_call.1} parent=1 // pred_region
      %79 = dma.done [#allocation9], 1024
    $region45: #{tpu_custom_call.1} parent=1 // pred_fallthru
      _
    %v81 = vld [vmem:[#allocation2] sm:$0xff]
    %v82 = vpack.c.bf16 %v81, %v81
    %v83 = vld [vmem:[#allocation5] sm:$0xf]
    %v84 = vld [vmem:[#allocation5 + $0x4] sm:$0xf]
    %v85 = vld [vmem:[%s2] sm:$0x1]
    %v87 = vlaneseq
    %v88 = vshrl.u32 %v87, 7
    %v89 = vsub.s32 0, %v88
    %v90 = vrot.slane %v85, %v89
    %v94 = vunpack.c.l.b16 %v83
    %v95 = vunpack.c.l.b16 %v84
    %v96 = vpack.c.b16 %v95, %v94
    %vm98 = vcmask 130048
    %v100 = vsel %vm98, %v82, 0
    %102 = vmatprep.subr.bf16.mxu0 0
    %103 = vmatpush1.bf16.msra.mxu0 0
    %104 = vmatprep.subr.bf16.mxu0 0
    %105 = vmatpush1.bf16.msra.mxu0 0
    %106 = vmatprep.subr.bf16.mxu0 0
    %107 = vmatpush1.bf16.msra.mxu0 0
    %108 = vmatprep.subr.bf16.mxu0 0
    %109 = vmatpush1.bf16.msra.mxu0 0
    %110 = vmatprep.subr.bf16.mxu0 0
    %111 = vmatpush1.bf16.msra.mxu0 0
    %112 = vmatprep.subr.bf16.mxu0 0
    %113 = vmatpush1.bf16.msra.mxu0 0
    %114 = vmatprep.subr.bf16.mxu0 0
    %115 = vmatpush1.bf16.msra.mxu0 0
    %116 = vmatprep.subr.bf16.mxu0 0
    %117 = vmatpush1.bf16.msra.mxu0 %v96
    %118 = vmatprep.subr.bf16.mxu0 0
    %119 = vmatpush2.bf16.msra.mxu0 0
    %120 = vmatprep.subr.bf16.mxu0 0
    %121 = vmatpush2.bf16.msra.mxu0 0
    %122 = vmatprep.subr.bf16.mxu0 0
    %123 = vmatpush2.bf16.msra.mxu0 0
    %124 = vmatprep.subr.bf16.mxu0 0
    %125 = vmatpush2.bf16.msra.mxu0 0
    %126 = vmatprep.subr.bf16.mxu0 0
    %127 = vmatpush2.bf16.msra.mxu0 0
    %128 = vmatprep.subr.bf16.mxu0 0
    %129 = vmatpush2.bf16.msra.mxu0 0
    %130 = vmatprep.subr.bf16.mxu0 0
    %131 = vmatpush2.bf16.msra.mxu0 0
    %132 = vmatprep.subr.bf16.mxu0 0
    %133 = vmatpush2.bf16.msra.mxu0 0
    %134 = vmatprep.mubr.bf16.mxu0 0
    %135 = vmatmul.mubr.bf16.gmra.mxu0 %v100
    %v136 = vpop.f32.mrf.mxu0
    %v137 = vadd.f32 %v90, %v136
    %v138 = vpop.f32.mrf.mxu0
    %v139 = vpop.f32.mrf.mxu0
    %v140 = vpop.f32.mrf.mxu0
    %141 = vdwg.mxu0
    %v142 = vmax.f32 %v137, 0.0
    %v143 = vpack.c.bf16 %v142, %v142
    %v144 = vld [vmem:[#allocation7] sm:$0xf]
    %v145 = vld [vmem:[#allocation7 + $0x4] sm:$0xf]
    %v146 = vld [vmem:[#allocation7 + $0x8] sm:$0xf]
    %v147 = vld [vmem:[#allocation7 + $0xc] sm:$0xf]
    %v148 = vld [vmem:[#allocation7 + $0x10] sm:$0xf]
    %v149 = vld [vmem:[#allocation7 + $0x14] sm:$0xf]
    %v150 = vld [vmem:[#allocation7 + $0x18] sm:$0xf]
    %v151 = vld [vmem:[#allocation7 + $0x1c] sm:$0xf]
    %v152 = vld [vmem:[#allocation7 + $0x20] sm:$0xf]
    %v153 = vld [vmem:[#allocation7 + $0x24] sm:$0xf]
    %v154 = vld [vmem:[#allocation7 + $0x28] sm:$0xf]
    %v155 = vld [vmem:[#allocation7 + $0x2c] sm:$0xf]
    %v156 = vld [vmem:[#allocation7 + $0x30] sm:$0xf]
    %v157 = vld [vmem:[#allocation7 + $0x34] sm:$0xf]
    %v158 = vld [vmem:[#allocation7 + $0x38] sm:$0xf]
    %v159 = vld [vmem:[#allocation7 + $0x3c] sm:$0xf]
    %v160 = vld [vmem:[%s4] sm:$0x1]
    %v162 = vlaneseq
    %v163 = vshrl.u32 %v162, 7
    %v164 = vsub.s32 0, %v163
    %v165 = vrot.slane %v160, %v164
    %v183 = vunpack.c.l.b16 %v144
    %v184 = vunpack.c.l.b16 %v145
    %v185 = vunpack.c.l.b16 %v146
    %v186 = vunpack.c.l.b16 %v147
    %v187 = vunpack.c.l.b16 %v148
    %v188 = vunpack.c.l.b16 %v149
    %v189 = vunpack.c.l.b16 %v150
    %v190 = vunpack.c.l.b16 %v151
    %v191 = vunpack.c.l.b16 %v152
    %v192 = vunpack.c.l.b16 %v153
    %v193 = vunpack.c.l.b16 %v154
    %v194 = vunpack.c.l.b16 %v155
    %v195 = vunpack.c.l.b16 %v156
    %v196 = vunpack.c.l.b16 %v157
    %v197 = vunpack.c.l.b16 %v158
    %v198 = vunpack.c.l.b16 %v159
    %v199 = vpack.c.b16 %v184, %v183
    %v200 = vpack.c.b16 %v186, %v185
    %v201 = vpack.c.b16 %v188, %v187
    %v202 = vpack.c.b16 %v190, %v189
    %v203 = vpack.c.b16 %v192, %v191
    %v204 = vpack.c.b16 %v194, %v193
    %v205 = vpack.c.b16 %v196, %v195
    %v206 = vpack.c.b16 %v198, %v197
    %215 = vmatprep.subr.bf16.mxu0 0
    %216 = vmatpush1.bf16.msra.mxu0 %v206
    %217 = vmatprep.subr.bf16.mxu0 0
    %218 = vmatpush1.bf16.msra.mxu0 %v205
    %219 = vmatprep.subr.bf16.mxu0 0
    %220 = vmatpush1.bf16.msra.mxu0 %v204
    %221 = vmatprep.subr.bf16.mxu0 0
    %222 = vmatpush1.bf16.msra.mxu0 %v203
    %223 = vmatprep.subr.bf16.mxu0 0
    %224 = vmatpush1.bf16.msra.mxu0 %v202
    %225 = vmatprep.subr.bf16.mxu0 0
    %226 = vmatpush1.bf16.msra.mxu0 %v201
    %227 = vmatprep.subr.bf16.mxu0 0
    %228 = vmatpush1.bf16.msra.mxu0 %v200
    %229 = vmatprep.subr.bf16.mxu0 0
    %230 = vmatpush1.bf16.msra.mxu0 %v199
    %231 = vmatprep.subr.bf16.mxu0 0
    %232 = vmatpush2.bf16.msra.mxu0 0
    %233 = vmatprep.subr.bf16.mxu0 0
    %234 = vmatpush2.bf16.msra.mxu0 0
    %235 = vmatprep.subr.bf16.mxu0 0
    %236 = vmatpush2.bf16.msra.mxu0 0
    %237 = vmatprep.subr.bf16.mxu0 0
    %238 = vmatpush2.bf16.msra.mxu0 0
    %239 = vmatprep.subr.bf16.mxu0 0
    %240 = vmatpush2.bf16.msra.mxu0 0
    %241 = vmatprep.subr.bf16.mxu0 0
    %242 = vmatpush2.bf16.msra.mxu0 0
    %243 = vmatprep.subr.bf16.mxu0 0
    %244 = vmatpush2.bf16.msra.mxu0 0
    %245 = vmatprep.subr.bf16.mxu0 0
    %246 = vmatpush2.bf16.msra.mxu0 0
    %247 = vmatprep.mubr.bf16.mxu0 0
    %248 = vmatmul.mubr.bf16.gmra.mxu0 %v143
    %v249 = vpop.f32.mrf.mxu0
    %v250 = vadd.f32 %v165, %v249
    %v251 = vpop.f32.mrf.mxu0
    %v252 = vpop.f32.mrf.mxu0
    %v253 = vpop.f32.mrf.mxu0
    %254 = vdwg.mxu0
    %v255 = vmax.f32 %v250, 0.0
    %v256 = vpack.c.bf16 %v255, %v255
    %v257 = vld [vmem:[#allocation8] sm:$0xf]
    %v258 = vld [vmem:[#allocation8 + $0x4] sm:$0xf]
    %v259 = vld [vmem:[#allocation8 + $0x8] sm:$0xf]
    %v260 = vld [vmem:[#allocation8 + $0xc] sm:$0xf]
    %v261 = vld [vmem:[#allocation8 + $0x10] sm:$0xf]
    %v262 = vld [vmem:[#allocation8 + $0x14] sm:$0xf]
    %v263 = vld [vmem:[#allocation8 + $0x18] sm:$0xf]
    %v264 = vld [vmem:[#allocation8 + $0x1c] sm:$0xf]
    %v265 = vld [vmem:[#allocation8 + $0x20] sm:$0xf]
    %v266 = vld [vmem:[#allocation8 + $0x24] sm:$0xf]
    %v267 = vld [vmem:[#allocation8 + $0x28] sm:$0xf]
    %v268 = vld [vmem:[#allocation8 + $0x2c] sm:$0xf]
    %v269 = vld [vmem:[#allocation8 + $0x30] sm:$0xf]
    %v270 = vld [vmem:[#allocation8 + $0x34] sm:$0xf]
    %v271 = vld [vmem:[#allocation8 + $0x38] sm:$0xf]
    %v272 = vld [vmem:[#allocation8 + $0x3c] sm:$0xf]
    %v273 = vld [vmem:[%s6] sm:$0x1]
    %v275 = vlaneseq
    %v276 = vshrl.u32 %v275, 7
    %v277 = vsub.s32 0, %v276
    %v278 = vrot.slane %v273, %v277
    %v296 = vunpack.c.l.b16 %v257
    %v297 = vunpack.c.l.b16 %v258
    %v298 = vunpack.c.l.b16 %v259
    %v299 = vunpack.c.l.b16 %v260
    %v300 = vunpack.c.l.b16 %v261
    %v301 = vunpack.c.l.b16 %v262
    %v302 = vunpack.c.l.b16 %v263
    %v303 = vunpack.c.l.b16 %v264
    %v304 = vunpack.c.l.b16 %v265
    %v305 = vunpack.c.l.b16 %v266
    %v306 = vunpack.c.l.b16 %v267
    %v307 = vunpack.c.l.b16 %v268
    %v308 = vunpack.c.l.b16 %v269
    %v309 = vunpack.c.l.b16 %v270
    %v310 = vunpack.c.l.b16 %v271
    %v311 = vunpack.c.l.b16 %v272
    %v312 = vpack.c.b16 %v297, %v296
    %v313 = vpack.c.b16 %v299, %v298
    %v314 = vpack.c.b16 %v301, %v300
    %v315 = vpack.c.b16 %v303, %v302
    %v316 = vpack.c.b16 %v305, %v304
    %v317 = vpack.c.b16 %v307, %v306
    %v318 = vpack.c.b16 %v309, %v308
    %v319 = vpack.c.b16 %v311, %v310
    %328 = vmatprep.subr.bf16.mxu0 0
    %329 = vmatpush1.bf16.msra.mxu0 %v319
    %330 = vmatprep.subr.bf16.mxu0 0
    %331 = vmatpush1.bf16.msra.mxu0 %v318
    %332 = vmatprep.subr.bf16.mxu0 0
    %333 = vmatpush1.bf16.msra.mxu0 %v317
    %334 = vmatprep.subr.bf16.mxu0 0
    %335 = vmatpush1.bf16.msra.mxu0 %v316
    %336 = vmatprep.subr.bf16.mxu0 0
    %337 = vmatpush1.bf16.msra.mxu0 %v315
    %338 = vmatprep.subr.bf16.mxu0 0
    %339 = vmatpush1.bf16.msra.mxu0 %v314
    %340 = vmatprep.subr.bf16.mxu0 0
    %341 = vmatpush1.bf16.msra.mxu0 %v313
    %342 = vmatprep.subr.bf16.mxu0 0
    %343 = vmatpush1.bf16.msra.mxu0 %v312
    %344 = vmatprep.subr.bf16.mxu0 0
    %345 = vmatpush2.bf16.msra.mxu0 0
    %346 = vmatprep.subr.bf16.mxu0 0
    %347 = vmatpush2.bf16.msra.mxu0 0
    %348 = vmatprep.subr.bf16.mxu0 0
    %349 = vmatpush2.bf16.msra.mxu0 0
    %350 = vmatprep.subr.bf16.mxu0 0
    %351 = vmatpush2.bf16.msra.mxu0 0
    %352 = vmatprep.subr.bf16.mxu0 0
    %353 = vmatpush2.bf16.msra.mxu0 0
    %354 = vmatprep.subr.bf16.mxu0 0
    %355 = vmatpush2.bf16.msra.mxu0 0
    %356 = vmatprep.subr.bf16.mxu0 0
    %357 = vmatpush2.bf16.msra.mxu0 0
    %358 = vmatprep.subr.bf16.mxu0 0
    %359 = vmatpush2.bf16.msra.mxu0 0
    %360 = vmatprep.mubr.bf16.mxu0 0
    %361 = vmatmul.mubr.bf16.gmra.mxu0 %v256
    %v362 = vpop.f32.mrf.mxu0
    %v363 = vadd.f32 %v278, %v362
    %v364 = vpop.f32.mrf.mxu0
    %v365 = vpop.f32.mrf.mxu0
    %v366 = vpop.f32.mrf.mxu0
    %367 = vdwg.mxu0
    %v368 = vpack.c.bf16 %v363, %v363
    %369 = vst [vmem:[#allocation10] sm:$0xf] %v368
    // Predicated region
    $region46: #{tpu_custom_call.1} parent=1 // pred_check
      _
    $region47: #{tpu_custom_call.1} parent=1 // pred_check_branch
      %371 = sbr.rel (0) target = $region49
    $region48: #{tpu_custom_call.1} parent=1 // pred_region
      %s373 = ssub.s32 64, 64
      %374 = vsyncadd [#allocation4], %s373
      %s376 = sshll.u32 [#allocation10], 4
      %s377 = int_to_ptr.vmem [resolvable:$true] %s376
      %379 = dma.vmem_to_hbm [thread:$0]  %s377, 64, %s7, [#allocation4]
    $region49: #{tpu_custom_call.1} parent=1 // pred_fallthru
      _
    // Predicated region
    $region50: #{tpu_custom_call.1} parent=1 // pred_check
      _
    $region51: #{tpu_custom_call.1} parent=1 // pred_check_branch
      %381 = sbr.rel (0) target = $region53
    $region52: #{tpu_custom_call.1} parent=1 // pred_region
      %382 = dma.done [#allocation4], 64
    $region53: #{tpu_custom_call.1} parent=1 // pred_fallthru
      _
    %383 = vsyncpa [#allocation3], 1
    %384 = vsyncpa [#allocation6], 1
    %385 = vsyncpa [#allocation9], 1
    %386 = vsyncpa [#allocation4], 1

</llo_original>
